<compile_context>
chip_gen: v7x
topology: tpu7x:2x2x1
jax: 0.10.0
libtpu: 0.0.40
codegen_flags: <defaults>
</compile_context>

<pallas_src>
import functools
import math

import jax
import jax.numpy as jnp
from jax.experimental import pallas as pl
from jax.experimental.pallas import tpu as pltpu


VMEM_LIMIT_BYTES = 48 * 1024 * 1024  # > scoped defaults (16/32 MiB), < v7x physical 64 MiB


def _round_up(a, m):
    return (a + m - 1) // m * m


def _gelu(x):
    # TODO(synk): nn.GELU() defaults to the exact erf form; we use the tanh
    # approximation (guaranteed EUP lowering). Max deviation ~1e-3, below the
    # bf16-matmul noise floor.
    c = math.sqrt(2.0 / math.pi)
    return 0.5 * x * (1.0 + jnp.tanh(c * (x + 0.044715 * x * x * x)))


# ---------------------------------------------------------------------------
# group == 1 : fused dense MLP kernel
#   grid = (row_tiles [parallel], k_tiles over Din [arbitrary])
# ---------------------------------------------------------------------------

def _mlp_dense_kernel(x_ref, w1_ref, b1_ref, w2_ref, b2_ref, o_ref, h_acc):
    k = pl.program_id(1)

    @pl.when(k == 0)
    def _():
        h_acc[...] = jnp.zeros_like(h_acc)

    # fc1 partial product for this K tile: bf16 x bf16 on the MXU, f32 accumulate.
    h_acc[...] += jnp.dot(x_ref[...], w1_ref[...], preferred_element_type=jnp.float32)

    @pl.when(k == pl.num_programs(1) - 1)
    def _():
        # Epilogue in f32: bias + GELU, then fc2 straight out of VMEM scratch.
        h = _gelu(h_acc[...] + b1_ref[...])
        y = jnp.dot(h.astype(w2_ref.dtype), w2_ref[...],
                    preferred_element_type=jnp.float32) + b2_ref[...]
        o_ref[...] = y.astype(o_ref.dtype)


def _mlp_dense(x2, w1, b1, w2, b2):
    n, d_in = x2.shape
    d_hid = w1.shape[1]
    d_out = w2.shape[1]

    # Row tile: as large as reasonable, multiple of 8 (sublane); pad N to fit.
    tn = 256 if n >= 256 else _round_up(n, 8)
    n_pad = _round_up(n, tn)

    # K tile over Din: big (512) when Din is large and 128-aligned, else full Din.
    if d_in > 512 and d_in % 128 == 0:
        tk = next(t for t in (512, 256, 128) if d_in % t == 0)
    else:
        tk = d_in

    xp = x2 if n_pad == n else jnp.pad(x2, ((0, n_pad - n), (0, 0)))
    xp = xp.astype(jnp.bfloat16)
    w1b = w1.astype(jnp.bfloat16)
    w2b = w2.astype(jnp.bfloat16)

    out = pl.pallas_call(
        _mlp_dense_kernel,
        out_shape=jax.ShapeDtypeStruct((n_pad, d_out), jnp.float32),
        grid=(n_pad // tn, d_in // tk),
        in_specs=[
            pl.BlockSpec((tn, tk), lambda i, k: (i, k)),        # x row/K tile
            pl.BlockSpec((tk, d_hid), lambda i, k: (k, 0)),     # fc1 weight K tile
            pl.BlockSpec((1, d_hid), lambda i, k: (0, 0)),      # fc1 bias (resident)
            pl.BlockSpec((d_hid, d_out), lambda i, k: (0, 0)),  # fc2 weight (resident)
            pl.BlockSpec((1, d_out), lambda i, k: (0, 0)),      # fc2 bias (resident)
        ],
        out_specs=pl.BlockSpec((tn, d_out), lambda i, k: (i, 0)),
        scratch_shapes=[pltpu.VMEM((tn, d_hid), jnp.float32)],  # hidden accumulator
        compiler_params=pltpu.CompilerParams(
            dimension_semantics=("parallel", "arbitrary"),
            vmem_limit_bytes=VMEM_LIMIT_BYTES,
        ),
    )(xp, w1b, b1, w2b, b2)
    return out[:n]


# ---------------------------------------------------------------------------
# group > 1 : fused grouped (block-diagonal) MLP kernel
#   grid = (row_tiles [parallel]); each group's fc1+GELU+fc2 is independent.
# ---------------------------------------------------------------------------

def _mlp_group_kernel(x_ref, w1_ref, b1_ref, w2_ref, b2_ref, o_ref):
    h = jnp.einsum("gnd,gdh->gnh", x_ref[...], w1_ref[...],
                   preferred_element_type=jnp.float32) + b1_ref[...]
    h = _gelu(h)
    y = jnp.einsum("gnh,gho->gno", h.astype(w2_ref.dtype), w2_ref[...],
                   preferred_element_type=jnp.float32) + b2_ref[...]
    o_ref[...] = y.astype(o_ref.dtype)


def _mlp_grouped(x2, w1, b1, w2, b2, group):
    n, d_in = x2.shape
    g = group
    dg, hg = w1.shape[1], w1.shape[2]
    og = w2.shape[2]
    d_out = g * og

    tn = 256 if n >= 256 else _round_up(n, 8)
    n_pad = _round_up(n, tn)

    # Present (G, N, Dg) so each group is a clean lane-dense matmul inside the kernel.
    xg = x2.reshape(n, g, dg).transpose(1, 0, 2)
    if n_pad != n:
        xg = jnp.pad(xg, ((0, 0), (0, n_pad - n), (0, 0)))
    xg = xg.astype(jnp.bfloat16)
    w1b = w1.astype(jnp.bfloat16)
    w2b = w2.astype(jnp.bfloat16)
    b1g = b1.reshape(g, 1, hg)   # hidden layout is group-major, matching GroupLinear
    b2g = b2.reshape(g, 1, og)

    out = pl.pallas_call(
        _mlp_group_kernel,
        out_shape=jax.ShapeDtypeStruct((g, n_pad, og), jnp.float32),
        grid=(n_pad // tn,),
        in_specs=[
            pl.BlockSpec((g, tn, dg), lambda i: (0, i, 0)),
            pl.BlockSpec((g, dg, hg), lambda i: (0, 0, 0)),
            pl.BlockSpec((g, 1, hg), lambda i: (0, 0, 0)),
            pl.BlockSpec((g, hg, og), lambda i: (0, 0, 0)),
            pl.BlockSpec((g, 1, og), lambda i: (0, 0, 0)),
        ],
        out_specs=pl.BlockSpec((g, tn, og), lambda i: (0, i, 0)),
        compiler_params=pltpu.CompilerParams(
            dimension_semantics=("parallel",),
            vmem_limit_bytes=VMEM_LIMIT_BYTES,
        ),
    )(xg, w1b, b1g, w2b, b2g)
    return out[:, :n, :].transpose(1, 0, 2).reshape(n, d_out)


# ---------------------------------------------------------------------------
# module-level forward / params / pure-JAX reference
# ---------------------------------------------------------------------------

def mlp_forward(x, params):
    # x: (t, b, d) as in the PyTorch module's usage; dropout = identity (inference).
    t, b, d = x.shape
    x2 = x.reshape(t * b, d)
    if params["group"] == 1:
        y = _mlp_dense(x2, params["w1"], params["b1"], params["w2"], params["b2"])
    else:
        y = _mlp_grouped(x2, params["w1"], params["b1"], params["w2"], params["b2"],
                         params["group"])
    return y.reshape(t, b, -1)


def init_mlp_params(key, in_features, hidden_features=None, out_features=None, group=1):
    out_features = out_features or in_features
    hidden_features = hidden_features or in_features
    k1, k2, k3, k4 = jax.random.split(key, 4)

    def u(k, shape, fan_in):
        bound = 1.0 / math.sqrt(fan_in)
        return jax.random.uniform(k, shape, jnp.float32, -bound, bound)

    if group == 1:
        w1 = u(k1, (in_features, hidden_features), in_features)
        w2 = u(k2, (hidden_features, out_features), hidden_features)
    else:
        gd = in_features // group
        gh = hidden_features // group
        go = out_features // group
        w1 = u(k1, (group, gd, gh), gd)
        w2 = u(k2, (group, gh, go), gh)
    return {
        "group": group,
        "w1": w1,
        "b1": u(k3, (1, hidden_features), in_features),
        "w2": w2,
        "b2": u(k4, (1, out_features), hidden_features),
    }


def mlp_reference(x, params):
    # Pure-JAX reference mirroring the PyTorch forward (exact-erf GELU, f32).
    t, b, d = x.shape
    x2 = x.reshape(t * b, d).astype(jnp.float32)
    g = params["group"]
    if g == 1:
        h = jax.nn.gelu(x2 @ params["w1"] + params["b1"], approximate=False)
        y = h @ params["w2"] + params["b2"]
    else:
        n = x2.shape[0]
        dg = d // g
        h = jnp.einsum("ngd,gdh->ngh", x2.reshape(n, g, dg),
                       params["w1"]).reshape(n, -1) + params["b1"]
        h = jax.nn.gelu(h, approximate=False)
        hg = params["w2"].shape[1]
        y = jnp.einsum("ngh,gho->ngo", h.reshape(n, g, hg),
                       params["w2"]).reshape(n, -1) + params["b2"]
    return y.reshape(t, b, -1)


if __name__ == "__main__":
    T, B, D_IN, D_HID, D_OUT = 8, 2, 32, 128, 32

    key = jax.random.PRNGKey(0)
    kx, kp1, kp2 = jax.random.split(key, 3)
    x = jax.random.normal(kx, (T, B, D_IN), jnp.float32)

    # group == 1 (nn.Linear path)
    p_dense = init_mlp_params(kp1, D_IN, D_HID, D_OUT, group=1)
    y_dense = jax.block_until_ready(mlp_forward(x, p_dense))
    r_dense = mlp_reference(x, p_dense)
    assert y_dense.shape == (T, B, D_OUT), y_dense.shape
    assert bool(jnp.all(jnp.isfinite(y_dense)))
    assert float(jnp.max(jnp.abs(y_dense - r_dense))) < 1e-1

    # group > 1 (GroupLinear path)
    p_group = init_mlp_params(kp2, D_IN, D_HID, D_OUT, group=2)
    y_group = jax.block_until_ready(mlp_forward(x, p_group))
    r_group = mlp_reference(x, p_group)
    assert y_group.shape == (T, B, D_OUT), y_group.shape
    assert bool(jnp.all(jnp.isfinite(y_group)))
    assert float(jnp.max(jnp.abs(y_group - r_group))) < 1e-1

    print("KERNEL_OK")
</pallas_src>

<mosaic_0001>
module attributes {stable_mosaic.version = 11 : i64} {
  func.func @_mlp_dense_kernel(%arg0: i32, %arg1: i32, %arg2: memref<16x32xbf16, #tpu.memory_space<vmem>>, %arg3: memref<32x128xbf16, #tpu.memory_space<vmem>>, %arg4: memref<1x128xf32, #tpu.memory_space<vmem>>, %arg5: memref<128x32xbf16, #tpu.memory_space<vmem>>, %arg6: memref<1x32xf32, #tpu.memory_space<vmem>>, %arg7: memref<16x32xf32, #tpu.memory_space<vmem>>, %arg8: memref<16x128xf32, #tpu.memory_space<vmem>>) attributes {dimension_semantics = [#tpu.dimension_semantics<parallel>, #tpu.dimension_semantics<arbitrary>], iteration_bounds = array<i64: 1, 1>, scalar_prefetch = 0 : i64, scratch_operands = 1 : i64, tpu.core_type = #tpu.core_type<tc>, window_params = [{transform_indices = @transform_0, window_bounds = array<i64: 16, 32>}, {transform_indices = @transform_1, window_bounds = array<i64: 32, 128>}, {pipeline_mode = #tpu.pipeline_mode<synchronous>, transform_indices = @transform_2, window_bounds = array<i64: 1, 128>}, {pipeline_mode = #tpu.pipeline_mode<synchronous>, transform_indices = @transform_3, window_bounds = array<i64: 128, 32>}, {pipeline_mode = #tpu.pipeline_mode<synchronous>, transform_indices = @transform_4, window_bounds = array<i64: 1, 32>}, {transform_indices = @transform_5, window_bounds = array<i64: 16, 32>}]} {
    %c0_i32 = arith.constant 0 : i32
    %0 = arith.cmpi eq, %arg1, %c0_i32 : i32
    %1 = arith.extui %0 : i1 to i32
    %c0_i32_0 = arith.constant 0 : i32
    %2 = arith.cmpi ne, %1, %c0_i32_0 : i32
    scf.if %2 {
      %cst_10 = arith.constant 0.000000e+00 : f32
      %12 = vector.broadcast %cst_10 : f32 to vector<16x128xf32>
      %c0_11 = arith.constant 0 : index
      %c0_12 = arith.constant 0 : index
      %13 = vector.load %arg8[%c0_11, %c0_12] : memref<16x128xf32, #tpu.memory_space<vmem>>, vector<16x128xf32>
      tpu.vector_store %arg8[%c0_11, %c0_12], %12 {strides = array<i32>} : memref<16x128xf32, #tpu.memory_space<vmem>>, vector<16x128xf32>,
    } else {
    }
    %c0 = arith.constant 0 : index
    %c0_1 = arith.constant 0 : index
    %3 = vector.load %arg8[%c0, %c0_1] : memref<16x128xf32, #tpu.memory_space<vmem>>, vector<16x128xf32>
    %c0_2 = arith.constant 0 : index
    %c0_3 = arith.constant 0 : index
    %4 = vector.load %arg2[%c0_2, %c0_3] : memref<16x32xbf16, #tpu.memory_space<vmem>>, vector<16x32xbf16>
    %c0_4 = arith.constant 0 : index
    %c0_5 = arith.constant 0 : index
    %5 = vector.load %arg3[%c0_4, %c0_5] : memref<32x128xbf16, #tpu.memory_space<vmem>>, vector<32x128xbf16>
    %cst = arith.constant dense<0.000000e+00> : vector<16x128xf32>
    %6 = tpu.matmul %4, %5, %cst {dimension_numbers = #tpu.dot_dimension_numbers<[1], [0], [0], [1], [0, 0, 1, 1], [], []>} : vector<16x32xbf16>, vector<32x128xbf16>, vector<16x128xf32> -> vector<16x128xf32>
    %7 = arith.addf %3, %6 : vector<16x128xf32>
    %c0_6 = arith.constant 0 : index
    %c0_7 = arith.constant 0 : index
    %8 = vector.load %arg8[%c0_6, %c0_7] : memref<16x128xf32, #tpu.memory_space<vmem>>, vector<16x128xf32>
    tpu.vector_store %arg8[%c0_6, %c0_7], %7 {strides = array<i32>} : memref<16x128xf32, #tpu.memory_space<vmem>>, vector<16x128xf32>,
    %c0_i32_8 = arith.constant 0 : i32
    %9 = arith.cmpi eq, %arg1, %c0_i32_8 : i32
    %10 = arith.extui %9 : i1 to i32
    %c0_i32_9 = arith.constant 0 : i32
    %11 = arith.cmpi ne, %10, %c0_i32_9 : i32
    scf.if %11 {
      %c0_10 = arith.constant 0 : index
      %c0_11 = arith.constant 0 : index
      %12 = vector.load %arg8[%c0_10, %c0_11] : memref<16x128xf32, #tpu.memory_space<vmem>>, vector<16x128xf32>
      %c0_12 = arith.constant 0 : index
      %c0_13 = arith.constant 0 : index
      %13 = vector.load %arg4[%c0_12, %c0_13] : memref<1x128xf32, #tpu.memory_space<vmem>>, vector<1x128xf32>
      %14 = vector.broadcast %13 : vector<1x128xf32> to vector<16x128xf32>
      %15 = arith.addf %12, %14 : vector<16x128xf32>
      %cst_14 = arith.constant 5.000000e-01 : f32
      %16 = vector.broadcast %cst_14 : f32 to vector<16x128xf32>
      %17 = arith.mulf %16, %15 : vector<16x128xf32>
      %cst_15 = arith.constant 4.471500e-02 : f32
      %18 = vector.broadcast %cst_15 : f32 to vector<16x128xf32>
      %19 = arith.mulf %18, %15 : vector<16x128xf32>
      %20 = arith.mulf %19, %15 : vector<16x128xf32>
      %21 = arith.mulf %20, %15 : vector<16x128xf32>
      %22 = arith.addf %15, %21 : vector<16x128xf32>
      %cst_16 = arith.constant 0.797884583 : f32
      %23 = vector.broadcast %cst_16 : f32 to vector<16x128xf32>
      %24 = arith.mulf %23, %22 : vector<16x128xf32>
      %25 = math.tanh %24 : vector<16x128xf32>
      %cst_17 = arith.constant 1.000000e+00 : f32
      %26 = vector.broadcast %cst_17 : f32 to vector<16x128xf32>
      %27 = arith.addf %26, %25 : vector<16x128xf32>
      %28 = arith.mulf %17, %27 : vector<16x128xf32>
      %29 = arith.truncf %28 : vector<16x128xf32> to vector<16x128xbf16>
      %c0_18 = arith.constant 0 : index
      %c0_19 = arith.constant 0 : index
      %30 = vector.load %arg5[%c0_18, %c0_19] : memref<128x32xbf16, #tpu.memory_space<vmem>>, vector<128x32xbf16>
      %cst_20 = arith.constant dense<0.000000e+00> : vector<16x32xf32>
      %31 = tpu.matmul %29, %30, %cst_20 {dimension_numbers = #tpu.dot_dimension_numbers<[1], [0], [0], [1], [0, 0, 1, 1], [], []>} : vector<16x128xbf16>, vector<128x32xbf16>, vector<16x32xf32> -> vector<16x32xf32>
      %c0_21 = arith.constant 0 : index
      %c0_22 = arith.constant 0 : index
      %32 = vector.load %arg6[%c0_21, %c0_22] : memref<1x32xf32, #tpu.memory_space<vmem>>, vector<1x32xf32>
      %33 = vector.broadcast %32 : vector<1x32xf32> to vector<16x32xf32>
      %34 = arith.addf %31, %33 : vector<16x32xf32>
      %c0_23 = arith.constant 0 : index
      %c0_24 = arith.constant 0 : index
      %35 = vector.load %arg7[%c0_23, %c0_24] : memref<16x32xf32, #tpu.memory_space<vmem>>, vector<16x32xf32>
      tpu.vector_store %arg7[%c0_23, %c0_24], %34 {strides = array<i32>} : memref<16x32xf32, #tpu.memory_space<vmem>>, vector<16x32xf32>,
    } else {
    }
    return
  }
  func.func @transform_0(%arg0: i32, %arg1: i32) -> (i32, i32) {
    %c0_i32 = arith.constant 0 : i32
    return %arg0, %arg1 : i32, i32
  }
  func.func @transform_1(%arg0: i32, %arg1: i32) -> (i32, i32) {
    %c0_i32 = arith.constant 0 : i32
    %c0_i32_0 = arith.constant 0 : i32
    return %arg1, %c0_i32 : i32, i32
  }
  func.func @transform_2(%arg0: i32, %arg1: i32) -> (i32, i32) {
    %c0_i32 = arith.constant 0 : i32
    %c0_i32_0 = arith.constant 0 : i32
    %c0_i32_1 = arith.constant 0 : i32
    return %c0_i32, %c0_i32_0 : i32, i32
  }
  func.func @transform_3(%arg0: i32, %arg1: i32) -> (i32, i32) {
    %c0_i32 = arith.constant 0 : i32
    %c0_i32_0 = arith.constant 0 : i32
    %c0_i32_1 = arith.constant 0 : i32
    return %c0_i32, %c0_i32_0 : i32, i32
  }
  func.func @transform_4(%arg0: i32, %arg1: i32) -> (i32, i32) {
    %c0_i32 = arith.constant 0 : i32
    %c0_i32_0 = arith.constant 0 : i32
    %c0_i32_1 = arith.constant 0 : i32
    return %c0_i32, %c0_i32_0 : i32, i32
  }
  func.func @transform_5(%arg0: i32, %arg1: i32) -> (i32, i32) {
    %c0_i32 = arith.constant 0 : i32
    %c0_i32_0 = arith.constant 0 : i32
    return %arg0, %c0_i32 : i32, i32
  }
}

</mosaic_0001>

<llo_original>
// kernel: tpu_custom_call.1
$region0: #{tpu_custom_call.1}
  #allocation0 [shape = 'u32[]', space=smem, size = 0x4, offset = 0x4, fixed_abs, tag = 'smem constant byte address 0x4 - core index']
  #allocation1 [shape = 'u32[144,128]{1,0:T(1,128)}', space=vmem, size = 0x12000, scoped, tag = 'internal scratch']
  #allocation2 [shape = 'f32[16,128]{1,0:T(8,128)}', space=vmem, size = 0x2000, scoped, tag = 'scratch operand']
  %s0 = inlined_call_operand.vmem [shape: bf16[16,32], index: 0, kind: input, shape index: {}]
  %s1 = inlined_call_operand.vmem [shape: bf16[32,128], index: 1, kind: input, shape index: {}]
  %s2 = inlined_call_operand.vmem [shape: f32[1,128], index: 2, kind: input, shape index: {}]
  %s3 = inlined_call_operand.vmem [shape: bf16[128,32], index: 3, kind: input, shape index: {}]
  %s4 = inlined_call_operand.vmem [shape: f32[1,32], index: 4, kind: input, shape index: {}]
  %s5 = inlined_call_operand.hbm [shape: f32[16,32], index: 5, kind: output, shape index: {}]
  %s6 = sld [smem:[#allocation0]]
  $region38: #{tpu_custom_call.1} parent=0
    _
  %s8 = ssub.s32 1, %s6
  %s9 = scalar_select 0, %s8, %s6
  $region1: #{tpu_custom_call.1} parent=0
    #allocation3 [shape = 'u8[8192]{0}', space=vmem, size = 0x2000, scoped, tag = 'output window, operand 0, single buffered']
    #allocation4 [shape = 's32[1]{0}', space=sflag, size = 0x4, scoped, tag = 'scoped memory for tpu_custom_call.1']
    %10 = vsyncpa [#allocation4], 0
    // Predicated region
    $region2: #{tpu_custom_call.1} parent=1 // pred_check
      _
    $region3: #{tpu_custom_call.1} parent=1 // pred_check_branch
      %12 = sbr.rel (0) target = $region5
    $region4: #{tpu_custom_call.1} parent=1 // pred_region
      _
    $region5: #{tpu_custom_call.1} parent=1 // pred_fallthru
      _
    // Predicated region
    $region6: #{tpu_custom_call.1} parent=1 // pred_check
      _
    $region7: #{tpu_custom_call.1} parent=1 // pred_check_branch
      %14 = sbr.rel (0) target = $region9
    $region8: #{tpu_custom_call.1} parent=1 // pred_region
      _
    $region9: #{tpu_custom_call.1} parent=1 // pred_fallthru
      _
    // Predicated region
    $region10: #{tpu_custom_call.1} parent=1 // pred_check
      _
    $region11: #{tpu_custom_call.1} parent=1 // pred_check_branch
      %16 = sbr.rel (0) target = $region13
    $region12: #{tpu_custom_call.1} parent=1 // pred_region
      _
    $region13: #{tpu_custom_call.1} parent=1 // pred_fallthru
      _
    // Predicated region
    $region14: #{tpu_custom_call.1} parent=1 // pred_check
      _
    $region15: #{tpu_custom_call.1} parent=1 // pred_check_branch
      %18 = sbr.rel (0) target = $region17
    $region16: #{tpu_custom_call.1} parent=1 // pred_region
      _
    $region17: #{tpu_custom_call.1} parent=1 // pred_fallthru
      _
    // Predicated region
    $region18: #{tpu_custom_call.1} parent=1 // pred_check
      _
    $region19: #{tpu_custom_call.1} parent=1 // pred_check_branch
      %20 = sbr.rel (0) target = $region21
    $region20: #{tpu_custom_call.1} parent=1 // pred_region
      _
    $region21: #{tpu_custom_call.1} parent=1 // pred_fallthru
      _
    %p22 = scmp.eq.s32.totalorder 0, 0
    // Predicated region
    $region22: #{tpu_custom_call.1} parent=1 // pred_check
      %p23 = pneg %p22
    $region23: #{tpu_custom_call.1} parent=1 // pred_check_branch
      %25 = sbr.rel (%p23) target = $region25
    $region24: #{tpu_custom_call.1} parent=1 // pred_region
      %26 = vst [vmem:[#allocation2] sm:$0xff] 0.0
      %27 = vst [vmem:[#allocation2 + $0x8] sm:$0xff] 0.0
    $region25: #{tpu_custom_call.1} parent=1 // pred_fallthru
      _
    %v28 = vld [vmem:[#allocation2] sm:$0xff]
    %v29 = vld [vmem:[#allocation2 + $0x8] sm:$0xff]
    %v30 = vld [vmem:[%s0] sm:$0xf]
    %v31 = vld [vmem:[%s0 + $0x4] sm:$0xf]
    %v32 = vld [vmem:[%s1] sm:$0xf]
    %v33 = vld [vmem:[%s1 + $0x4] sm:$0xf]
    %v34 = vld [vmem:[%s1 + $0x8] sm:$0xf]
    %v35 = vld [vmem:[%s1 + $0xc] sm:$0xf]
    %v38 = vunpack.c.l.b16 %v30
    %v39 = vunpack.c.l.b16 %v31
    %v40 = vpack.c.b16 %v39, %v38
    %v45 = vunpack.c.l.b16 %v32
    %v46 = vunpack.c.l.b16 %v33
    %v47 = vunpack.c.l.b16 %v34
    %v48 = vunpack.c.l.b16 %v35
    %v49 = vpack.c.b16 %v46, %v45
    %v50 = vpack.c.b16 %v48, %v47
    %vm53 = vcmask 261120
    %v55 = vsel %vm53, %v40, 0
    %57 = vmatprep.subr.bf16.mxu0 0
    %58 = vmatpush1.bf16.msra.mxu0 %v49
    %59 = vmatprep.subr.bf16.mxu0 0
    %60 = vmatpush1.bf16.msra.mxu0 %v50
    %61 = vmatprep.subr.bf16.mxu0 0
    %62 = vmatpush1.bf16.msra.mxu0 0
    %63 = vmatprep.subr.bf16.mxu0 0
    %64 = vmatpush1.bf16.msra.mxu0 0
    %65 = vmatprep.subr.bf16.mxu0 0
    %66 = vmatpush1.bf16.msra.mxu0 0
    %67 = vmatprep.subr.bf16.mxu0 0
    %68 = vmatpush1.bf16.msra.mxu0 0
    %69 = vmatprep.subr.bf16.mxu0 0
    %70 = vmatpush1.bf16.msra.mxu0 0
    %71 = vmatprep.subr.bf16.mxu0 0
    %72 = vmatpush1.bf16.msra.mxu0 0
    %73 = vmatprep.subr.bf16.mxu0 0
    %74 = vmatpush1.bf16.msra.mxu0 0
    %75 = vmatprep.subr.bf16.mxu0 0
    %76 = vmatpush1.bf16.msra.mxu0 0
    %77 = vmatprep.subr.bf16.mxu0 0
    %78 = vmatpush1.bf16.msra.mxu0 0
    %79 = vmatprep.subr.bf16.mxu0 0
    %80 = vmatpush1.bf16.msra.mxu0 0
    %81 = vmatprep.subr.bf16.mxu0 0
    %82 = vmatpush1.bf16.msra.mxu0 0
    %83 = vmatprep.subr.bf16.mxu0 0
    %84 = vmatpush1.bf16.msra.mxu0 0
    %85 = vmatprep.subr.bf16.mxu0 0
    %86 = vmatpush1.bf16.msra.mxu0 0
    %87 = vmatprep.subr.bf16.mxu0 0
    %88 = vmatpush1.bf16.msra.mxu0 0
    %89 = vmatprep.mubr.bf16.mxu0 0
    %90 = vmatmul.mubr.bf16.gmra.mrb[0].mxu0 %v55
    %v91 = vpop.f32.mrb[0].mxu0
    %v92 = vadd.f32 0.0, %v91
    %v93 = vpop.f32.mrb[0].mxu0
    %v94 = vpop.f32.mrb[0].mxu0
    %v95 = vadd.f32 0.0, %v94
    %v96 = vpop.f32.mrb[0].mxu0
    %97 = vdwg.mxu0
    %v98 = vadd.f32 %v28, %v92
    %v99 = vadd.f32 %v29, %v95
    %100 = vst [vmem:[#allocation2] sm:$0xff] %v98
    %101 = vst [vmem:[#allocation2 + $0x8] sm:$0xff] %v99
    // Predicated region
    $region26: #{tpu_custom_call.1} parent=1 // pred_check
      %p102 = pneg %p22
    $region27: #{tpu_custom_call.1} parent=1 // pred_check_branch
      %104 = sbr.rel (%p102) target = $region29
    $region28: #{tpu_custom_call.1} parent=1 // pred_region
      %v105 = vld [vmem:[#allocation2] sm:$0xff]
      %v106 = vld [vmem:[#allocation2 + $0x8] sm:$0xff]
      %v107 = vld [vmem:[%s2] sm:$0x1]
      %v109 = vlaneseq
      %v110 = vshrl.u32 %v109, 7
      %v111 = vsub.s32 0, %v110
      %v112 = vrot.slane %v107, %v111
      %v114 = vadd.f32 %v105, %v112
      %v115 = vadd.f32 %v106, %v112
      %v116 = vmul.f32 %v114, 0.5
      %v117 = vmul.f32 %v115, 0.5
      %v118 = vmul.f32 %v114, 0.044715
      %v119 = vmul.f32 %v115, 0.044715
      %v120 = vmul.f32 %v118, %v114
      %v121 = vmul.f32 %v119, %v115
      %v122 = vmul.f32 %v120, %v114
      %v123 = vmul.f32 %v121, %v115
      %v124 = vadd.f32 %v114, %v122
      %v125 = vadd.f32 %v115, %v123
      %v126 = vmul.f32 %v124, 0.7978846
      %v127 = vmul.f32 %v125, 0.7978846
      %v128 = vtanh.pop %v126
      %v129 = vtanh.pop %v127
      %v130 = vadd.f32 %v128, 1.0
      %v131 = vadd.f32 %v129, 1.0
      %v132 = vmul.f32 %v116, %v130
      %v133 = vmul.f32 %v117, %v131
      %v134 = vpack.c.bf16 %v133, %v132
      %v135 = vld [vmem:[%s3] sm:$0xf]
      %v136 = vld [vmem:[%s3 + $0x4] sm:$0xf]
      %v137 = vld [vmem:[%s3 + $0x8] sm:$0xf]
      %v138 = vld [vmem:[%s3 + $0xc] sm:$0xf]
      %v139 = vld [vmem:[%s3 + $0x10] sm:$0xf]
      %v140 = vld [vmem:[%s3 + $0x14] sm:$0xf]
      %v141 = vld [vmem:[%s3 + $0x18] sm:$0xf]
      %v142 = vld [vmem:[%s3 + $0x1c] sm:$0xf]
      %v143 = vld [vmem:[%s3 + $0x20] sm:$0xf]
      %v144 = vld [vmem:[%s3 + $0x24] sm:$0xf]
      %v145 = vld [vmem:[%s3 + $0x28] sm:$0xf]
      %v146 = vld [vmem:[%s3 + $0x2c] sm:$0xf]
      %v147 = vld [vmem:[%s3 + $0x30] sm:$0xf]
      %v148 = vld [vmem:[%s3 + $0x34] sm:$0xf]
      %v149 = vld [vmem:[%s3 + $0x38] sm:$0xf]
      %v150 = vld [vmem:[%s3 + $0x3c] sm:$0xf]
      %v151 = vld [vmem:[%s4] sm:$0x1]
      %v153 = vlaneseq
      %v154 = vshrl.u32 %v153, 7
      %v155 = vsub.s32 0, %v154
      %v156 = vrot.slane %v151, %v155
      %v174 = vunpack.c.l.b16 %v135
      %v175 = vunpack.c.l.b16 %v136
      %v176 = vunpack.c.l.b16 %v137
      %v177 = vunpack.c.l.b16 %v138
      %v178 = vunpack.c.l.b16 %v139
      %v179 = vunpack.c.l.b16 %v140
      %v180 = vunpack.c.l.b16 %v141
      %v181 = vunpack.c.l.b16 %v142
      %v182 = vunpack.c.l.b16 %v143
      %v183 = vunpack.c.l.b16 %v144
      %v184 = vunpack.c.l.b16 %v145
      %v185 = vunpack.c.l.b16 %v146
      %v186 = vunpack.c.l.b16 %v147
      %v187 = vunpack.c.l.b16 %v148
      %v188 = vunpack.c.l.b16 %v149
      %v189 = vunpack.c.l.b16 %v150
      %v190 = vpack.c.b16 %v175, %v174
      %v191 = vpack.c.b16 %v177, %v176
      %v192 = vpack.c.b16 %v179, %v178
      %v193 = vpack.c.b16 %v181, %v180
      %v194 = vpack.c.b16 %v183, %v182
      %v195 = vpack.c.b16 %v185, %v184
      %v196 = vpack.c.b16 %v187, %v186
      %v197 = vpack.c.b16 %v189, %v188
      %206 = vmatprep.subr.bf16.mxu0 0
      %207 = vmatpush1.bf16.msra.mxu0 %v190
      %208 = vmatprep.subr.bf16.mxu0 0
      %209 = vmatpush1.bf16.msra.mxu0 %v191
      %210 = vmatprep.subr.bf16.mxu0 0
      %211 = vmatpush1.bf16.msra.mxu0 %v192
      %212 = vmatprep.subr.bf16.mxu0 0
      %213 = vmatpush1.bf16.msra.mxu0 %v193
      %214 = vmatprep.subr.bf16.mxu0 0
      %215 = vmatpush1.bf16.msra.mxu0 %v194
      %216 = vmatprep.subr.bf16.mxu0 0
      %217 = vmatpush1.bf16.msra.mxu0 %v195
      %218 = vmatprep.subr.bf16.mxu0 0
      %219 = vmatpush1.bf16.msra.mxu0 %v196
      %220 = vmatprep.subr.bf16.mxu0 0
      %221 = vmatpush1.bf16.msra.mxu0 %v197
      %222 = vmatprep.subr.bf16.mxu0 0
      %223 = vmatpush1.bf16.msra.mxu0 0
      %224 = vmatprep.subr.bf16.mxu0 0
      %225 = vmatpush1.bf16.msra.mxu0 0
      %226 = vmatprep.subr.bf16.mxu0 0
      %227 = vmatpush1.bf16.msra.mxu0 0
      %228 = vmatprep.subr.bf16.mxu0 0
      %229 = vmatpush1.bf16.msra.mxu0 0
      %230 = vmatprep.subr.bf16.mxu0 0
      %231 = vmatpush1.bf16.msra.mxu0 0
      %232 = vmatprep.subr.bf16.mxu0 0
      %233 = vmatpush1.bf16.msra.mxu0 0
      %234 = vmatprep.subr.bf16.mxu0 0
      %235 = vmatpush1.bf16.msra.mxu0 0
      %236 = vmatprep.subr.bf16.mxu0 0
      %237 = vmatpush1.bf16.msra.mxu0 0
      %238 = vmatprep.mubr.bf16.mxu0 0
      %239 = vmatmul.mubr.bf16.gmra.mrb[0].mxu0 %v134
      %v240 = vpop.f32.mrb[0].mxu0
      %v241 = vadd.f32 %v156, %v240
      %v242 = vpop.f32.mrb[0].mxu0
      %v243 = vpop.f32.mrb[0].mxu0
      %v244 = vadd.f32 %v156, %v243
      %v245 = vpop.f32.mrb[0].mxu0
      %246 = vdwg.mxu0
      %247 = vst.msk [vmem:[#allocation3] sm:$0xff] %vm53, %v241
      %248 = vst.msk [vmem:[#allocation3 + $0x8] sm:$0xff] %vm53, %v244
    $region29: #{tpu_custom_call.1} parent=1 // pred_fallthru
      _
    // Predicated region
    $region30: #{tpu_custom_call.1} parent=1 // pred_check
      _
    $region31: #{tpu_custom_call.1} parent=1 // pred_check_branch
      %250 = sbr.rel (0) target = $region33
    $region32: #{tpu_custom_call.1} parent=1 // pred_region
      %s252 = ssub.s32 256, 256
      %253 = vsyncadd [#allocation4], %s252
      %s254 = sshll.u32 [#allocation3], 4
      %s255 = int_to_ptr.vmem [resolvable:$true] %s254
      %260 = dma.vmem_to_hbm [thread:$0]  %s255, 256, %s5, [#allocation4], 128, 128, 8
    $region33: #{tpu_custom_call.1} parent=1 // pred_fallthru
      _
    // Predicated region
    $region34: #{tpu_custom_call.1} parent=1 // pred_check
      _
    $region35: #{tpu_custom_call.1} parent=1 // pred_check_branch
      %262 = sbr.rel (0) target = $region37
    $region36: #{tpu_custom_call.1} parent=1 // pred_region
      %263 = dma.done [#allocation4], 256
    $region37: #{tpu_custom_call.1} parent=1 // pred_fallthru
      _
    %264 = vsyncpa [#allocation4], 1

</llo_original>
